<compile_context>
chip_gen: v5e
topology: v5e:2x2
jax: 0.10.0
libtpu: 0.0.40
codegen_flags: <defaults>
</compile_context>

<pallas_src>
import jax
import jax.numpy as jnp
from jax.experimental import pallas as pl
from jax.experimental.pallas import tpu as pltpu


_LANE = 128
_VMEM_STEP_BUDGET = 24 * 1024 * 1024   # double-buffered per-step x+out budget
_VMEM_LIMIT_BYTES = 32 * 1024 * 1024   # <= physical VMEM on v5e/v6e/v7x


def _cdiv(a, b):
    return -(-a // b)


def _round_up(x, m):
    return _cdiv(x, m) * m


def _rt_embedder_kernel(x_ref, w1_ref, b1_ref, w2_ref, b2_ref, o_ref):
    # x:  (tb, RT)  batch tile, native row-major layout
    # w1: (H, RT)   fc1.weight (torch (out, in) layout)
    # b1: (H, 1)    fc1.bias   (f32 column; lane-broadcast add)
    # w2: (H, H)    fc2.weight
    # b2: (H, 1)    fc2.bias   (f32 column)
    # o:  (H, tb)   lane-dense output tile
    x = x_ref[...].astype(w1_ref.dtype)

    # fc1: contract RT (last dim of both operands) -> (H, tb); f32 accumulate.
    h = jax.lax.dot_general(
        w1_ref[...], x,
        dimension_numbers=(((1,), (1,)), ((), ())),
        preferred_element_type=jnp.float32)
    h = h + b1_ref[...]

    # SiLU in f32: sigmoid's exp/reciprocal issue on the EUP slot, not VALU.
    h = h * jax.nn.sigmoid(h)

    # fc2: (H, H) @ (H, tb) -> (H, tb); keep bf16 weights on a bf16 MXU path,
    # f32 accumulation, f32 bias add, cast once on store.
    y = jnp.dot(w2_ref[...], h.astype(w2_ref.dtype),
                preferred_element_type=jnp.float32) + b2_ref[...]
    o_ref[...] = y.astype(o_ref.dtype)


def prepare_rt_embedder_params(fc1_w, fc1_b, fc2_w, fc2_b, *,
                               weights_dtype=jnp.float32):
    """One-time (hoisted) weight prep: torch-layout params -> kernel operands."""
    H, rt_size = fc1_w.shape
    assert fc2_w.shape == (H, H)
    return {
        "w1": jnp.asarray(fc1_w, weights_dtype),                 # (H, RT)
        "b1": jnp.asarray(fc1_b, jnp.float32).reshape(H, 1),     # (H, 1)
        "w2": jnp.asarray(fc2_w, weights_dtype),                 # (H, H)
        "b2": jnp.asarray(fc2_b, jnp.float32).reshape(H, 1),     # (H, 1)
    }


def _pick_batch_tile(B, block_b, x_itemsize, out_itemsize, H):
    if B <= _LANE:
        return B                                   # single block == full array
    tb = min(_round_up(max(block_b, _LANE), _LANE), (B // _LANE) * _LANE)
    # Keep >= ~8 grid steps for very large B (feeds both v7x TensorCores and
    # keeps double-buffering effective) without shrinking tiles below 2048.
    eight_way = _round_up(_cdiv(B, 8), _LANE)
    if eight_way >= 2048:
        tb = min(tb, eight_way)

    # VMEM cap: the x tile is lane-padded (RT=7 -> 128) in VMEM; out tile (H, tb).
    def step_bytes(t):
        return 2 * (t * _LANE * x_itemsize + H * t * out_itemsize)

    while tb > _LANE and step_bytes(tb) > _VMEM_STEP_BUDGET:
        tb = max(_LANE, _round_up(tb // 2, _LANE))
    return tb


def rt_embedder_lane_dense(RT, params, *, out_dtype=jnp.float32,
                           block_b=8192, x_buffers=2):
    """Pallas forward of RTEmbedder, returning the kernel-native (H, B) layout.

    Prefer this (or fuse into the consumer) over rt_embedder(): the (B, H)
    transpose is an extra full HBM pass on a memory-bound op.
    """
    B, rt_size = RT.shape
    w1, b1, w2, b2 = params["w1"], params["b1"], params["w2"], params["b2"]
    H = w1.shape[0]
    assert w1.shape == (H, rt_size) and w2.shape == (H, H)

    x_itemsize = jnp.dtype(RT.dtype).itemsize
    out_itemsize = jnp.dtype(out_dtype).itemsize
    tb = _pick_batch_tile(B, block_b, x_itemsize, out_itemsize, H)
    grid = (_cdiv(B, tb),)

    x_spec_kwargs = {}
    if x_buffers != 2:   # optional deeper pipelining of the (small) x tiles
        x_spec_kwargs["pipeline_mode"] = pl.Buffered(x_buffers)

    w_itemsize = jnp.dtype(w1.dtype).itemsize
    cost = pl.CostEstimate(
        flops=2 * B * H * (rt_size + H) + 3 * B * H,
        transcendentals=B * H,
        bytes_accessed=(B * rt_size * x_itemsize + B * H * out_itemsize
                        + (H * rt_size + H * H) * w_itemsize + 2 * H * 4),
    )

    return pl.pallas_call(
        _rt_embedder_kernel,
        out_shape=jax.ShapeDtypeStruct((H, B), out_dtype),
        grid_spec=pltpu.PrefetchScalarGridSpec(
            num_scalar_prefetch=0,
            grid=grid,
            in_specs=[
                # Batch tiles stream along the grid (partial tail handled by
                # Pallas; garbage overhang columns are never stored).
                pl.BlockSpec((tb, rt_size), lambda i: (i, 0), **x_spec_kwargs),
                # Tiny weights/biases stay VMEM-resident across all steps.
                pl.BlockSpec((H, rt_size), lambda i: (0, 0)),
                pl.BlockSpec((H, 1), lambda i: (0, 0)),
                pl.BlockSpec((H, H), lambda i: (0, 0)),
                pl.BlockSpec((H, 1), lambda i: (0, 0)),
            ],
            out_specs=pl.BlockSpec((H, tb), lambda i: (0, i)),
        ),
        compiler_params=pltpu.CompilerParams(
            dimension_semantics=("parallel",),
            vmem_limit_bytes=_VMEM_LIMIT_BYTES),
        cost_estimate=cost,
    )(RT, w1, b1, w2, b2)


def rt_embedder(RT, params, **kwargs):
    """PyTorch-parity forward: (B, RT) -> (B, H).

    NOTE: the trailing .T is an extra HBM pass done by XLA; consumers that can
    accept the lane-dense (H, B) layout should call rt_embedder_lane_dense().
    """
    return rt_embedder_lane_dense(RT, params, **kwargs).T


def rt_embedder_ref(RT, fc1_w, fc1_b, fc2_w, fc2_b):
    h = RT @ fc1_w.T + fc1_b
    h = h * jax.nn.sigmoid(h)
    return h @ fc2_w.T + fc2_b


if __name__ == "__main__":
    key = jax.random.PRNGKey(0)
    k_rt, k_w1, k_b1, k_w2, k_b2, k_big = jax.random.split(key, 6)

    B, RT_SIZE, HIDDEN = 8, 7, 32

    RT = jax.random.normal(k_rt, (B, RT_SIZE), dtype=jnp.float32)
    # Deterministic synthetic parameters in torch nn.Linear layout (out, in).
    fc1_w = jax.random.normal(k_w1, (HIDDEN, RT_SIZE), dtype=jnp.float32) * 0.2
    fc1_b = jax.random.normal(k_b1, (HIDDEN,), dtype=jnp.float32) * 0.05
    fc2_w = jax.random.normal(k_w2, (HIDDEN, HIDDEN), dtype=jnp.float32) * 0.2
    fc2_b = jax.random.normal(k_b2, (HIDDEN,), dtype=jnp.float32) * 0.05

    params = prepare_rt_embedder_params(fc1_w, fc1_b, fc2_w, fc2_b)

    # --- f32, tiny module-scale batch (single block) ---
    ref = rt_embedder_ref(RT, fc1_w, fc1_b, fc2_w, fc2_b)
    out = jax.block_until_ready(rt_embedder(RT, params))
    assert out.shape == (B, HIDDEN)
    assert jnp.allclose(out, ref, atol=1e-4, rtol=1e-4), "f32 small-batch mismatch"

    out_t = jax.block_until_ready(rt_embedder_lane_dense(RT, params))
    assert out_t.shape == (HIDDEN, B)
    assert jnp.allclose(out_t.T, ref, atol=1e-4, rtol=1e-4), "lane-dense mismatch"

    # --- f32, larger batch: multi-step grid with a partial boundary block ---
    B_big = 1000   # not a multiple of the tile -> exercises the partial tail
    RT_big = jax.random.normal(k_big, (B_big, RT_SIZE), dtype=jnp.float32)
    ref_big = rt_embedder_ref(RT_big, fc1_w, fc1_b, fc2_w, fc2_b)
    out_big = jax.block_until_ready(rt_embedder(RT_big, params))
    assert out_big.shape == (B_big, HIDDEN)
    assert jnp.allclose(out_big, ref_big, atol=1e-4, rtol=1e-4), "gridded f32 mismatch"

    # --- bf16 weights + bf16 output (halves the dominant store stream) ---
    params_bf16 = prepare_rt_embedder_params(
        fc1_w, fc1_b, fc2_w, fc2_b, weights_dtype=jnp.bfloat16)
    out_bf16 = jax.block_until_ready(
        rt_embedder(RT_big, params_bf16, out_dtype=jnp.bfloat16, block_b=256))
    assert out_bf16.shape == (B_big, HIDDEN) and out_bf16.dtype == jnp.bfloat16
    assert jnp.allclose(out_bf16.astype(jnp.float32), ref_big,
                        atol=7e-2, rtol=7e-2), "bf16 mismatch"

    print("KERNEL_OK")
</pallas_src>

<mosaic_0001>
module attributes {stable_mosaic.version = 11 : i64} {
  func.func @_rt_embedder_kernel(%arg0: i32, %arg1: memref<8x7xf32, #tpu.memory_space<vmem>>, %arg2: memref<32x7xf32, #tpu.memory_space<vmem>>, %arg3: memref<32x1xf32, #tpu.memory_space<vmem>>, %arg4: memref<32x32xf32, #tpu.memory_space<vmem>>, %arg5: memref<32x1xf32, #tpu.memory_space<vmem>>, %arg6: memref<32x8xf32, #tpu.memory_space<vmem>>) attributes {dimension_semantics = [#tpu.dimension_semantics<parallel>], iteration_bounds = array<i64: 1>, scalar_prefetch = 0 : i64, scratch_operands = 0 : i64, tpu.core_type = #tpu.core_type<tc>, window_params = [{transform_indices = @transform_0, window_bounds = array<i64: 8, 7>}, {pipeline_mode = #tpu.pipeline_mode<synchronous>, transform_indices = @transform_1, window_bounds = array<i64: 32, 7>}, {pipeline_mode = #tpu.pipeline_mode<synchronous>, transform_indices = @transform_2, window_bounds = array<i64: 32, 1>}, {pipeline_mode = #tpu.pipeline_mode<synchronous>, transform_indices = @transform_3, window_bounds = array<i64: 32, 32>}, {pipeline_mode = #tpu.pipeline_mode<synchronous>, transform_indices = @transform_4, window_bounds = array<i64: 32, 1>}, {transform_indices = @transform_5, window_bounds = array<i64: 32, 8>}]} {
    %c0 = arith.constant 0 : index
    %c0_0 = arith.constant 0 : index
    %0 = vector.load %arg1[%c0, %c0_0] : memref<8x7xf32, #tpu.memory_space<vmem>>, vector<8x7xf32>
    %c0_1 = arith.constant 0 : index
    %c0_2 = arith.constant 0 : index
    %1 = vector.load %arg2[%c0_1, %c0_2] : memref<32x7xf32, #tpu.memory_space<vmem>>, vector<32x7xf32>
    %cst = arith.constant dense<0.000000e+00> : vector<32x8xf32>
    %2 = tpu.matmul %1, %0, %cst {dimension_numbers = #tpu.dot_dimension_numbers<[1], [1], [0], [0], [0, 0, 1, 0], [], []>} : vector<32x7xf32>, vector<8x7xf32>, vector<32x8xf32> -> vector<32x8xf32>
    %c0_3 = arith.constant 0 : index
    %c0_4 = arith.constant 0 : index
    %3 = vector.load %arg3[%c0_3, %c0_4] : memref<32x1xf32, #tpu.memory_space<vmem>>, vector<32x1xf32>
    %4 = vector.broadcast %3 : vector<32x1xf32> to vector<32x8xf32>
    %5 = arith.addf %2, %4 : vector<32x8xf32>
    %6 = arith.negf %5 : vector<32x8xf32>
    %7 = math.exp %6 : vector<32x8xf32>
    %cst_5 = arith.constant 1.000000e+00 : f32
    %8 = vector.broadcast %cst_5 : f32 to vector<32x8xf32>
    %9 = arith.addf %8, %7 : vector<32x8xf32>
    %10 = arith.divf %8, %9 : vector<32x8xf32>
    %11 = arith.mulf %5, %10 : vector<32x8xf32>
    %c0_6 = arith.constant 0 : index
    %c0_7 = arith.constant 0 : index
    %12 = vector.load %arg4[%c0_6, %c0_7] : memref<32x32xf32, #tpu.memory_space<vmem>>, vector<32x32xf32>
    %cst_8 = arith.constant dense<0.000000e+00> : vector<32x8xf32>
    %13 = tpu.matmul %12, %11, %cst_8 {dimension_numbers = #tpu.dot_dimension_numbers<[1], [0], [0], [1], [0, 0, 1, 1], [], []>} : vector<32x32xf32>, vector<32x8xf32>, vector<32x8xf32> -> vector<32x8xf32>
    %c0_9 = arith.constant 0 : index
    %c0_10 = arith.constant 0 : index
    %14 = vector.load %arg5[%c0_9, %c0_10] : memref<32x1xf32, #tpu.memory_space<vmem>>, vector<32x1xf32>
    %15 = vector.broadcast %14 : vector<32x1xf32> to vector<32x8xf32>
    %16 = arith.addf %13, %15 : vector<32x8xf32>
    %c0_11 = arith.constant 0 : index
    %c0_12 = arith.constant 0 : index
    %17 = vector.load %arg6[%c0_11, %c0_12] : memref<32x8xf32, #tpu.memory_space<vmem>>, vector<32x8xf32>
    tpu.vector_store %arg6[%c0_11, %c0_12], %16 {strides = array<i32>} : memref<32x8xf32, #tpu.memory_space<vmem>>, vector<32x8xf32>,
    return
  }
  func.func @transform_0(%arg0: i32) -> (i32, i32) {
    %c0_i32 = arith.constant 0 : i32
    %c0_i32_0 = arith.constant 0 : i32
    return %arg0, %c0_i32 : i32, i32
  }
  func.func @transform_1(%arg0: i32) -> (i32, i32) {
    %c0_i32 = arith.constant 0 : i32
    %c0_i32_0 = arith.constant 0 : i32
    %c0_i32_1 = arith.constant 0 : i32
    return %c0_i32, %c0_i32_0 : i32, i32
  }
  func.func @transform_2(%arg0: i32) -> (i32, i32) {
    %c0_i32 = arith.constant 0 : i32
    %c0_i32_0 = arith.constant 0 : i32
    %c0_i32_1 = arith.constant 0 : i32
    return %c0_i32, %c0_i32_0 : i32, i32
  }
  func.func @transform_3(%arg0: i32) -> (i32, i32) {
    %c0_i32 = arith.constant 0 : i32
    %c0_i32_0 = arith.constant 0 : i32
    %c0_i32_1 = arith.constant 0 : i32
    return %c0_i32, %c0_i32_0 : i32, i32
  }
  func.func @transform_4(%arg0: i32) -> (i32, i32) {
    %c0_i32 = arith.constant 0 : i32
    %c0_i32_0 = arith.constant 0 : i32
    %c0_i32_1 = arith.constant 0 : i32
    return %c0_i32, %c0_i32_0 : i32, i32
  }
  func.func @transform_5(%arg0: i32) -> (i32, i32) {
    %c0_i32 = arith.constant 0 : i32
    %c0_i32_0 = arith.constant 0 : i32
    return %c0_i32, %arg0 : i32, i32
  }
}

</mosaic_0001>

<llo_original>
// kernel: tpu_custom_call.1
$region0: #{tpu_custom_call.1}
  #allocation0 [shape = 'u32[]', space=smem, size = 0x4, offset = 0x4, fixed_abs, tag = 'smem constant byte address 0x4 - core index']
  #allocation1 [shape = 'u32[72,128]{1,0:T(1,128)}', space=vmem, size = 0x9000, scoped, tag = 'internal scratch']
  %s0 = inlined_call_operand.vmem [shape: f32[8,7], index: 0, kind: input, shape index: {}]
  %s1 = inlined_call_operand.vmem [shape: f32[32,7], index: 1, kind: input, shape index: {}]
  %s2 = inlined_call_operand.vmem [shape: f32[32,1], index: 2, kind: input, shape index: {}]
  %s3 = inlined_call_operand.vmem [shape: f32[32,32], index: 3, kind: input, shape index: {}]
  %s4 = inlined_call_operand.vmem [shape: f32[32,1], index: 4, kind: input, shape index: {}]
  %s5 = inlined_call_operand.vmem [shape: f32[32,8], index: 5, kind: output, shape index: {}]
  %s6 = sld [smem:[#allocation0]]
  $region30: #{tpu_custom_call.1} parent=0
    _
  %s8 = ssub.s32 1, %s6
  %s9 = scalar_select 0, %s8, %s6
  // Predicated region
  $region2: #{tpu_custom_call.1} parent=0 // pred_check
    _
  $region3: #{tpu_custom_call.1} parent=0 // pred_check_branch
    %11 = sbr.rel (0) target = $region5
  $region4: #{tpu_custom_call.1} parent=0 // pred_region
    _
  $region5: #{tpu_custom_call.1} parent=0 // pred_fallthru
    _
  // Predicated region
  $region6: #{tpu_custom_call.1} parent=0 // pred_check
    _
  $region7: #{tpu_custom_call.1} parent=0 // pred_check_branch
    %13 = sbr.rel (0) target = $region9
  $region8: #{tpu_custom_call.1} parent=0 // pred_region
    _
  $region9: #{tpu_custom_call.1} parent=0 // pred_fallthru
    _
  // Predicated region
  $region10: #{tpu_custom_call.1} parent=0 // pred_check
    _
  $region11: #{tpu_custom_call.1} parent=0 // pred_check_branch
    %15 = sbr.rel (0) target = $region13
  $region12: #{tpu_custom_call.1} parent=0 // pred_region
    _
  $region13: #{tpu_custom_call.1} parent=0 // pred_fallthru
    _
  // Predicated region
  $region14: #{tpu_custom_call.1} parent=0 // pred_check
    _
  $region15: #{tpu_custom_call.1} parent=0 // pred_check_branch
    %17 = sbr.rel (0) target = $region17
  $region16: #{tpu_custom_call.1} parent=0 // pred_region
    _
  $region17: #{tpu_custom_call.1} parent=0 // pred_fallthru
    _
  // Predicated region
  $region18: #{tpu_custom_call.1} parent=0 // pred_check
    _
  $region19: #{tpu_custom_call.1} parent=0 // pred_check_branch
    %19 = sbr.rel (0) target = $region21
  $region20: #{tpu_custom_call.1} parent=0 // pred_region
    _
  $region21: #{tpu_custom_call.1} parent=0 // pred_fallthru
    _
  %v20 = vld [vmem:[%s0] sm:$0xff]
  %v21 = vld [vmem:[%s1] sm:$0xff]
  %v22 = vld [vmem:[%s1 + $0x8] sm:$0xff]
  %v23 = vld [vmem:[%s1 + $0x10] sm:$0xff]
  %v24 = vld [vmem:[%s1 + $0x18] sm:$0xff]
  %v25 = vld [vmem:[%s2] sm:$0xff]
  %v26 = vld [vmem:[%s2 + $0x8] sm:$0xff]
  %v27 = vld [vmem:[%s2 + $0x10] sm:$0xff]
  %v28 = vld [vmem:[%s2 + $0x18] sm:$0xff]
  %30 = vset.pattern.permute.xlu0 0
  %31 = vperm.xlu0 %30, %v25
  %v32 = vpop.permute.xlu0 %31
  %35 = vset.pattern.permute.xlu0 0
  %36 = vperm.xlu0 %35, %v26
  %v37 = vpop.permute.xlu0 %36
  %40 = vset.pattern.permute.xlu0 0
  %41 = vperm.xlu0 %40, %v27
  %v42 = vpop.permute.xlu0 %41
  %45 = vset.pattern.permute.xlu0 0
  %46 = vperm.xlu0 %45, %v28
  %v47 = vpop.permute.xlu0 %46
  %vm49 = vcmask 56320
  %v51 = vsel %vm49, %v21, 0
  %v54 = vsel %vm49, %v22, 0
  %v57 = vsel %vm49, %v23, 0
  %v60 = vsel %vm49, %v24, 0
  %v63 = vsel %vm49, %v20, 0
  %65 = vmatpush.xpose.msra.mxu0 0.0
  %66 = vmatpush.xpose.msra.mxu0 0.0
  %67 = vmatpush.xpose.msra.mxu0 0.0
  %68 = vmatpush.xpose.msra.mxu0 0.0
  %69 = vmatpush.xpose.msra.mxu0 0.0
  %70 = vmatpush.xpose.msra.mxu0 0.0
  %71 = vmatpush.xpose.msra.mxu0 0.0
  %72 = vmatpush.xpose.msra.mxu0 0.0
  %73 = vmatpush.xpose.msra.mxu0 0.0
  %74 = vmatpush.xpose.msra.mxu0 0.0
  %75 = vmatpush.xpose.msra.mxu0 0.0
  %76 = vmatpush.xpose.msra.mxu0 0.0
  %77 = vmatpush.xpose.msra.mxu0 0.0
  %78 = vmatpush.xpose.msra.mxu0 0.0
  %79 = vmatpush.xpose.msra.mxu0 0.0
  %80 = vmatpush.xpose.msra.mxu0 %v63
  %81 = vmatmul.f32.gmra.mxu0 %v51
  %v82 = vpop.f32.mrf.mxu0
  %v83 = vadd.f32 %v32, %v82
  %84 = vmatmul.f32.gmra.mxu0 %v54
  %v85 = vpop.f32.mrf.mxu0
  %v86 = vadd.f32 %v37, %v85
  %87 = vmatmul.f32.gmra.mxu0 %v57
  %v88 = vpop.f32.mrf.mxu0
  %v89 = vadd.f32 %v42, %v88
  %90 = vmatmul.f32.gmra.mxu0 %v60
  %v91 = vpop.f32.mrf.mxu0
  %v92 = vadd.f32 %v47, %v91
  %93 = vdwg.mxu0
  %v94 = vxor.u32 %v83, 2147483648
  %v95 = vxor.u32 %v86, 2147483648
  %v96 = vxor.u32 %v89, 2147483648
  %v97 = vxor.u32 %v92, 2147483648
  %v98 = vmul.f32 %v94, 1.442695
  %v99 = vpow.pop %v98
  %v100 = vmul.f32 %v95, 1.442695
  %v101 = vpow.pop %v100
  %v102 = vmul.f32 %v96, 1.442695
  %v103 = vpow.pop %v102
  %v104 = vmul.f32 %v97, 1.442695
  %v105 = vpow.pop %v104
  %v106 = vadd.f32 %v99, 1.0
  %v107 = vadd.f32 %v101, 1.0
  %v108 = vadd.f32 %v103, 1.0
  %v109 = vadd.f32 %v105, 1.0
  %v110 = vrcp.pop %v106
  %v111 = vmul.f32 %v106, %v110
  %v112 = vsub.f32 1.0, %v111
  %v113 = vmul.f32 %v110, %v112
  %v114 = vadd.f32 %v110, %v113
  %vm115 = vweird.f32 %v106
  %vm116 = vweird.f32 %v110
  %vm117 = vmor %vm115, %vm116
  %v118 = vsel %vm117, %v110, %v114
  %v119 = vand.u32 2147483647, %v106
  %vm120 = vcmp.eq.f32.partialorder %v119, 8.507059e+37
  %v121 = vand.u32 %v106, 2147483648
  %v122 = vor.u32 1.1754944e-38, %v121
  %v123 = vsel %vm120, %v122, %v118
  %v124 = vmul.f32 1.0, %v123
  %v125 = vrcp.pop %v107
  %v126 = vmul.f32 %v107, %v125
  %v127 = vsub.f32 1.0, %v126
  %v128 = vmul.f32 %v125, %v127
  %v129 = vadd.f32 %v125, %v128
  %vm130 = vweird.f32 %v107
  %vm131 = vweird.f32 %v125
  %vm132 = vmor %vm130, %vm131
  %v133 = vsel %vm132, %v125, %v129
  %v134 = vand.u32 2147483647, %v107
  %vm135 = vcmp.eq.f32.partialorder %v134, 8.507059e+37
  %v136 = vand.u32 %v107, 2147483648
  %v137 = vor.u32 1.1754944e-38, %v136
  %v138 = vsel %vm135, %v137, %v133
  %v139 = vmul.f32 1.0, %v138
  %v140 = vrcp.pop %v108
  %v141 = vmul.f32 %v108, %v140
  %v142 = vsub.f32 1.0, %v141
  %v143 = vmul.f32 %v140, %v142
  %v144 = vadd.f32 %v140, %v143
  %vm145 = vweird.f32 %v108
  %vm146 = vweird.f32 %v140
  %vm147 = vmor %vm145, %vm146
  %v148 = vsel %vm147, %v140, %v144
  %v149 = vand.u32 2147483647, %v108
  %vm150 = vcmp.eq.f32.partialorder %v149, 8.507059e+37
  %v151 = vand.u32 %v108, 2147483648
  %v152 = vor.u32 1.1754944e-38, %v151
  %v153 = vsel %vm150, %v152, %v148
  %v154 = vmul.f32 1.0, %v153
  %v155 = vrcp.pop %v109
  %v156 = vmul.f32 %v109, %v155
  %v157 = vsub.f32 1.0, %v156
  %v158 = vmul.f32 %v155, %v157
  %v159 = vadd.f32 %v155, %v158
  %vm160 = vweird.f32 %v109
  %vm161 = vweird.f32 %v155
  %vm162 = vmor %vm160, %vm161
  %v163 = vsel %vm162, %v155, %v159
  %v164 = vand.u32 2147483647, %v109
  %vm165 = vcmp.eq.f32.partialorder %v164, 8.507059e+37
  %v166 = vand.u32 %v109, 2147483648
  %v167 = vor.u32 1.1754944e-38, %v166
  %v168 = vsel %vm165, %v167, %v163
  %v169 = vmul.f32 1.0, %v168
  %v170 = vmul.f32 %v83, %v124
  %v171 = vmul.f32 %v86, %v139
  %v172 = vmul.f32 %v89, %v154
  %v173 = vmul.f32 %v92, %v169
  %v174 = vld [vmem:[%s3] sm:$0xff]
  %v175 = vld [vmem:[%s3 + $0x8] sm:$0xff]
  %v176 = vld [vmem:[%s3 + $0x10] sm:$0xff]
  %v177 = vld [vmem:[%s3 + $0x18] sm:$0xff]
  %v178 = vld [vmem:[%s4] sm:$0xff]
  %v179 = vld [vmem:[%s4 + $0x8] sm:$0xff]
  %v180 = vld [vmem:[%s4 + $0x10] sm:$0xff]
  %v181 = vld [vmem:[%s4 + $0x18] sm:$0xff]
  %183 = vset.pattern.permute.xlu0 0
  %184 = vperm.xlu0 %183, %v178
  %v185 = vpop.permute.xlu0 %184
  %188 = vset.pattern.permute.xlu0 0
  %189 = vperm.xlu0 %188, %v179
  %v190 = vpop.permute.xlu0 %189
  %193 = vset.pattern.permute.xlu0 0
  %194 = vperm.xlu0 %193, %v180
  %v195 = vpop.permute.xlu0 %194
  %198 = vset.pattern.permute.xlu0 0
  %199 = vperm.xlu0 %198, %v181
  %v200 = vpop.permute.xlu0 %199
  %vm202 = vcmask 261120
  %v204 = vsel %vm202, %v174, 0
  %v207 = vsel %vm202, %v175, 0
  %v210 = vsel %vm202, %v176, 0
  %v213 = vsel %vm202, %v177, 0
  %215 = vmatpush.msra.mxu0 0.0
  %216 = vmatpush.msra.mxu0 0.0
  %217 = vmatpush.msra.mxu0 0.0
  %218 = vmatpush.msra.mxu0 0.0
  %219 = vmatpush.msra.mxu0 0.0
  %220 = vmatpush.msra.mxu0 0.0
  %221 = vmatpush.msra.mxu0 0.0
  %222 = vmatpush.msra.mxu0 0.0
  %223 = vmatpush.msra.mxu0 0.0
  %224 = vmatpush.msra.mxu0 0.0
  %225 = vmatpush.msra.mxu0 0.0
  %226 = vmatpush.msra.mxu0 0.0
  %227 = vmatpush.msra.mxu0 %v173
  %228 = vmatpush.msra.mxu0 %v172
  %229 = vmatpush.msra.mxu0 %v171
  %230 = vmatpush.msra.mxu0 %v170
  %231 = vmatmul.f32.gmra.mxu0 %v204
  %v232 = vpop.f32.mrf.mxu0
  %v233 = vadd.f32 %v185, %v232
  %234 = vmatmul.f32.gmra.mxu0 %v207
  %v235 = vpop.f32.mrf.mxu0
  %v236 = vadd.f32 %v190, %v235
  %237 = vmatmul.f32.gmra.mxu0 %v210
  %v238 = vpop.f32.mrf.mxu0
  %v239 = vadd.f32 %v195, %v238
  %240 = vmatmul.f32.gmra.mxu0 %v213
  %v241 = vpop.f32.mrf.mxu0
  %v242 = vadd.f32 %v200, %v241
  %243 = vdwg.mxu0
  %vm244 = vcmask 64512
  %245 = vst.msk [vmem:[%s5] sm:$0xff] %vm244, %v233
  %246 = vst.msk [vmem:[%s5 + $0x8] sm:$0xff] %vm244, %v236
  %247 = vst.msk [vmem:[%s5 + $0x10] sm:$0xff] %vm244, %v239
  %248 = vst.msk [vmem:[%s5 + $0x18] sm:$0xff] %vm244, %v242
  // Predicated region
  $region22: #{tpu_custom_call.1} parent=0 // pred_check
    _
  $region23: #{tpu_custom_call.1} parent=0 // pred_check_branch
    %250 = sbr.rel (0) target = $region25
  $region24: #{tpu_custom_call.1} parent=0 // pred_region
    _
  $region25: #{tpu_custom_call.1} parent=0 // pred_fallthru
    _
  // Predicated region
  $region26: #{tpu_custom_call.1} parent=0 // pred_check
    _
  $region27: #{tpu_custom_call.1} parent=0 // pred_check_branch
    %252 = sbr.rel (0) target = $region29
  $region28: #{tpu_custom_call.1} parent=0 // pred_region
    _
  $region29: #{tpu_custom_call.1} parent=0 // pred_fallthru
    _

</llo_original>
